<compile_context>
chip_gen: v6e
topology: v6e:2x2x1
jax: 0.10.0
libtpu: 0.0.40
codegen_flags: <defaults>
</compile_context>

<pallas_src>
import functools

import jax
import jax.numpy as jnp
from jax import lax
from jax.experimental import pallas as pl
from jax.experimental.pallas import tpu as pltpu

HIDDEN = 16  # hidden width fixed by the PyTorch module


def _sigmoid(z, dtype):
    """sigmoid(z) = 0.5*(1 + tanh(z/2)): one EUP transcendental per element
    (vs exp + reciprocal).  `dtype` controls activation precision (bf16 halves
    EUP vreg pushes on v6e/v7x; use f32 for exactness / on v5e)."""
    z = z.astype(dtype)
    return 0.5 * (jnp.tanh(0.5 * z) + 1.0)


def _mlp_sigmoid_kernel(x_ref, w1_ref, b1_ref, w2_ref, b2_ref, w3_ref, b3_ref,
                        o_ref):
    """Fused forward for one batch tile, batch kept on the 128-lane axis.

    x_ref:  (bt, n_in)   native layout straight from HBM (no wrapper transpose)
    wN_ref: (out, in)    PyTorch layout, compute dtype (f32 default / bf16)
    bN_ref: (out, 1)     f32 column bias
    o_ref:  (n_out, bt)  lane-dense output tile
    """
    cdt = w1_ref.dtype                                   # matmul/activation compute dtype

    x = x_ref[...].astype(cdt)                           # (bt, n_in); in-kernel cast is free VPU work

    # Layer 1: contract on the rhs last dim -> (16, bt); MXU handles the
    # "A @ B^T" dimension numbers without a materialized transpose.
    z1 = lax.dot_general(w1_ref[...], x, (((1,), (1,)), ((), ())),
                         preferred_element_type=jnp.float32)
    h1 = _sigmoid(z1 + b1_ref[...], cdt)                 # (16, bt), dense vregs

    z2 = jnp.dot(w2_ref[...], h1, preferred_element_type=jnp.float32)
    h2 = _sigmoid(z2 + b2_ref[...], cdt)                 # (16, bt)

    z3 = jnp.dot(w3_ref[...], h2, preferred_element_type=jnp.float32)
    y = _sigmoid(z3 + b3_ref[...], jnp.float32)          # (n_out, bt), final layer in f32

    o_ref[...] = y.astype(o_ref.dtype)


@functools.partial(
    jax.jit,
    static_argnames=("batch_tile", "compute_dtype", "transposed_output"))
def sigmoid_model_forward(x, params, *, batch_tile=8192,
                          compute_dtype=jnp.float32,
                          transposed_output=False):
    """x: (B, n_input). params: PyTorch-layout weights (out, in), biases (out, 1).

    Returns (B, n_output) (module contract).  With transposed_output=True it
    returns (n_out, B) straight from the kernel and skips the trailing XLA
    transpose pass (saves ~2*n_out*B*4 bytes of HBM + one launch).
    compute_dtype=jnp.bfloat16 is a faster option on v6e/v7x (bf16 tanh halves
    EUP pushes); keep the f32 default on v5e or when exact f32 math is needed.
    """
    B, n_in = x.shape
    n_out = params["w3"].shape[0]

    # ---- batch tile selection -------------------------------------------
    bt = min(batch_tile, B)
    if bt < B:
        bt = max(128, (bt // 128) * 128)          # lane/sublane aligned tiles when tiling
    if B >= 4 * 128:
        # Keep >= 4 grid steps so both v7x TensorCores (dimension_semantics
        # "parallel") each see a full input/output DMA pipeline.
        per_core = pl.cdiv(B, 4)
        per_core = ((per_core + 127) // 128) * 128
        bt = min(bt, per_core)
    grid = (pl.cdiv(B, bt),)

    # Weights/biases are tiny; cast them here (negligible) -- x is NOT touched.
    w1 = params["w1"].astype(compute_dtype)       # (16, n_in)
    w2 = params["w2"].astype(compute_dtype)       # (16, 16)
    w3 = params["w3"].astype(compute_dtype)       # (n_out, 16)
    b1 = params["b1"].astype(jnp.float32)         # (16, 1)
    b2 = params["b2"].astype(jnp.float32)         # (16, 1)
    b3 = params["b3"].astype(jnp.float32)         # (n_out, 1)

    # Tiny weights/biases: full block, constant index map -> stay resident.
    full = lambda a: pl.BlockSpec(a.shape, lambda i: (0, 0))

    param_bytes = sum(int(p.size) * p.dtype.itemsize
                      for p in (w1, b1, w2, b2, w3, b3))
    cost = pl.CostEstimate(
        flops=2 * B * (n_in * HIDDEN + HIDDEN * HIDDEN + HIDDEN * n_out),
        transcendentals=B * (2 * HIDDEN + n_out),
        bytes_accessed=B * (n_in * x.dtype.itemsize + n_out * x.dtype.itemsize)
        + param_bytes,
    )

    out_t = pl.pallas_call(
        _mlp_sigmoid_kernel,
        out_shape=jax.ShapeDtypeStruct((n_out, B), x.dtype),
        grid_spec=pl.GridSpec(
            grid=grid,
            in_specs=[
                pl.BlockSpec((bt, n_in), lambda i: (i, 0)),   # x in native layout
                full(w1), full(b1),
                full(w2), full(b2),
                full(w3), full(b3),
            ],
            out_specs=pl.BlockSpec((n_out, bt), lambda i: (0, i)),  # lane-dense
        ),
        compiler_params=pltpu.CompilerParams(
            dimension_semantics=("parallel",)),
        cost_estimate=cost,
    )(x, w1, b1, w2, b2, w3, b3)

    if transposed_output:
        return out_t                              # (n_out, B), no extra pass
    return out_t.T                                # (B, n_out), module contract


def init_params(key, n_input, n_output):
    """Deterministic init mirroring nn.Linear (PyTorch (out, in) layout)."""
    ks = jax.random.split(key, 6)

    def linear(kw, kb, fan_in, fan_out):
        bound = float(fan_in) ** -0.5
        w = jax.random.uniform(kw, (fan_out, fan_in), jnp.float32, -bound, bound)
        b = jax.random.uniform(kb, (fan_out, 1), jnp.float32, -bound, bound)
        return w, b

    w1, b1 = linear(ks[0], ks[1], n_input, HIDDEN)
    w2, b2 = linear(ks[2], ks[3], HIDDEN, HIDDEN)
    w3, b3 = linear(ks[4], ks[5], HIDDEN, n_output)
    return {"w1": w1, "b1": b1, "w2": w2, "b2": b2, "w3": w3, "b3": b3}


def reference_forward(x, p):
    """Pure-JAX f32 reference identical to the PyTorch module."""
    h = jax.nn.sigmoid(x @ p["w1"].T + p["b1"].T)
    h = jax.nn.sigmoid(h @ p["w2"].T + p["b2"].T)
    return jax.nn.sigmoid(h @ p["w3"].T + p["b3"].T)


if __name__ == "__main__":
    key = jax.random.PRNGKey(0)
    k_x, k_p, k_x2 = jax.random.split(key, 3)

    n_input, n_output = 32, 4
    params = init_params(k_p, n_input, n_output)

    # --- small case matching the module spec (batch=8), default f32 path ---
    x_small = jax.random.normal(k_x, (8, n_input), jnp.float32)
    ref_small = reference_forward(x_small, params)

    out_small = jax.block_until_ready(sigmoid_model_forward(x_small, params))
    assert out_small.shape == (8, n_output)
    assert jnp.allclose(out_small, ref_small, atol=2e-3, rtol=2e-3), \
        "f32 kernel mismatch vs reference"

    # --- bf16 fast path (halves EUP pushes on v6e/v7x), looser tolerance ---
    out_bf16 = jax.block_until_ready(
        sigmoid_model_forward(x_small, params, compute_dtype=jnp.bfloat16))
    assert out_bf16.shape == (8, n_output)
    assert jnp.allclose(out_bf16, ref_small, atol=2e-2, rtol=2e-2), \
        "bf16 kernel mismatch vs reference"

    # --- larger batch: 4-step grid of 128-row lane tiles --------------------
    x_big = jax.random.normal(k_x2, (512, n_input), jnp.float32)
    ref_big = reference_forward(x_big, params)

    out_big = jax.block_until_ready(
        sigmoid_model_forward(x_big, params, batch_tile=128))
    assert out_big.shape == (512, n_output)
    assert jnp.allclose(out_big, ref_big, atol=2e-3, rtol=2e-3), \
        "tiled kernel mismatch vs reference"

    # --- (n_out, B) fast-path output: skips the trailing XLA transpose ------
    out_nb = jax.block_until_ready(
        sigmoid_model_forward(x_big, params, transposed_output=True))
    assert out_nb.shape == (n_output, 512)
    assert jnp.allclose(out_nb.T, ref_big, atol=2e-3, rtol=2e-3), \
        "transposed-output kernel mismatch vs reference"

    print("KERNEL_OK")
</pallas_src>

<mosaic_0001>
module attributes {stable_mosaic.version = 11 : i64} {
  func.func @_mlp_sigmoid_kernel(%arg0: i32, %arg1: memref<8x32xf32, #tpu.memory_space<vmem>>, %arg2: memref<16x32xf32, #tpu.memory_space<vmem>>, %arg3: memref<16x1xf32, #tpu.memory_space<vmem>>, %arg4: memref<16x16xf32, #tpu.memory_space<vmem>>, %arg5: memref<16x1xf32, #tpu.memory_space<vmem>>, %arg6: memref<4x16xf32, #tpu.memory_space<vmem>>, %arg7: memref<4x1xf32, #tpu.memory_space<vmem>>, %arg8: memref<4x8xf32, #tpu.memory_space<vmem>>) attributes {dimension_semantics = [#tpu.dimension_semantics<parallel>], iteration_bounds = array<i64: 1>, scalar_prefetch = 0 : i64, scratch_operands = 0 : i64, tpu.core_type = #tpu.core_type<tc>, window_params = [{transform_indices = @transform_0, window_bounds = array<i64: 8, 32>}, {pipeline_mode = #tpu.pipeline_mode<synchronous>, transform_indices = @transform_1, window_bounds = array<i64: 16, 32>}, {pipeline_mode = #tpu.pipeline_mode<synchronous>, transform_indices = @transform_2, window_bounds = array<i64: 16, 1>}, {pipeline_mode = #tpu.pipeline_mode<synchronous>, transform_indices = @transform_3, window_bounds = array<i64: 16, 16>}, {pipeline_mode = #tpu.pipeline_mode<synchronous>, transform_indices = @transform_4, window_bounds = array<i64: 16, 1>}, {pipeline_mode = #tpu.pipeline_mode<synchronous>, transform_indices = @transform_5, window_bounds = array<i64: 4, 16>}, {pipeline_mode = #tpu.pipeline_mode<synchronous>, transform_indices = @transform_6, window_bounds = array<i64: 4, 1>}, {transform_indices = @transform_7, window_bounds = array<i64: 4, 8>}]} {
    %c0 = arith.constant 0 : index
    %c0_0 = arith.constant 0 : index
    %0 = vector.load %arg1[%c0, %c0_0] : memref<8x32xf32, #tpu.memory_space<vmem>>, vector<8x32xf32>
    %c0_1 = arith.constant 0 : index
    %c0_2 = arith.constant 0 : index
    %1 = vector.load %arg2[%c0_1, %c0_2] : memref<16x32xf32, #tpu.memory_space<vmem>>, vector<16x32xf32>
    %cst = arith.constant dense<0.000000e+00> : vector<16x8xf32>
    %2 = tpu.matmul %1, %0, %cst {dimension_numbers = #tpu.dot_dimension_numbers<[1], [1], [0], [0], [0, 0, 1, 0], [], []>} : vector<16x32xf32>, vector<8x32xf32>, vector<16x8xf32> -> vector<16x8xf32>
    %c0_3 = arith.constant 0 : index
    %c0_4 = arith.constant 0 : index
    %3 = vector.load %arg3[%c0_3, %c0_4] : memref<16x1xf32, #tpu.memory_space<vmem>>, vector<16x1xf32>
    %4 = vector.broadcast %3 : vector<16x1xf32> to vector<16x8xf32>
    %5 = arith.addf %2, %4 : vector<16x8xf32>
    %cst_5 = arith.constant 5.000000e-01 : f32
    %6 = vector.broadcast %cst_5 : f32 to vector<16x8xf32>
    %7 = arith.mulf %6, %5 : vector<16x8xf32>
    %8 = math.tanh %7 : vector<16x8xf32>
    %cst_6 = arith.constant 1.000000e+00 : f32
    %9 = vector.broadcast %cst_6 : f32 to vector<16x8xf32>
    %10 = arith.addf %8, %9 : vector<16x8xf32>
    %cst_7 = arith.constant 5.000000e-01 : f32
    %11 = vector.broadcast %cst_7 : f32 to vector<16x8xf32>
    %12 = arith.mulf %11, %10 : vector<16x8xf32>
    %c0_8 = arith.constant 0 : index
    %c0_9 = arith.constant 0 : index
    %13 = vector.load %arg4[%c0_8, %c0_9] : memref<16x16xf32, #tpu.memory_space<vmem>>, vector<16x16xf32>
    %cst_10 = arith.constant dense<0.000000e+00> : vector<16x8xf32>
    %14 = tpu.matmul %13, %12, %cst_10 {dimension_numbers = #tpu.dot_dimension_numbers<[1], [0], [0], [1], [0, 0, 1, 1], [], []>} : vector<16x16xf32>, vector<16x8xf32>, vector<16x8xf32> -> vector<16x8xf32>
    %c0_11 = arith.constant 0 : index
    %c0_12 = arith.constant 0 : index
    %15 = vector.load %arg5[%c0_11, %c0_12] : memref<16x1xf32, #tpu.memory_space<vmem>>, vector<16x1xf32>
    %16 = vector.broadcast %15 : vector<16x1xf32> to vector<16x8xf32>
    %17 = arith.addf %14, %16 : vector<16x8xf32>
    %cst_13 = arith.constant 5.000000e-01 : f32
    %18 = vector.broadcast %cst_13 : f32 to vector<16x8xf32>
    %19 = arith.mulf %18, %17 : vector<16x8xf32>
    %20 = math.tanh %19 : vector<16x8xf32>
    %cst_14 = arith.constant 1.000000e+00 : f32
    %21 = vector.broadcast %cst_14 : f32 to vector<16x8xf32>
    %22 = arith.addf %20, %21 : vector<16x8xf32>
    %cst_15 = arith.constant 5.000000e-01 : f32
    %23 = vector.broadcast %cst_15 : f32 to vector<16x8xf32>
    %24 = arith.mulf %23, %22 : vector<16x8xf32>
    %c0_16 = arith.constant 0 : index
    %c0_17 = arith.constant 0 : index
    %25 = vector.load %arg6[%c0_16, %c0_17] : memref<4x16xf32, #tpu.memory_space<vmem>>, vector<4x16xf32>
    %cst_18 = arith.constant dense<0.000000e+00> : vector<4x8xf32>
    %26 = tpu.matmul %25, %24, %cst_18 {dimension_numbers = #tpu.dot_dimension_numbers<[1], [0], [0], [1], [0, 0, 1, 1], [], []>} : vector<4x16xf32>, vector<16x8xf32>, vector<4x8xf32> -> vector<4x8xf32>
    %c0_19 = arith.constant 0 : index
    %c0_20 = arith.constant 0 : index
    %27 = vector.load %arg7[%c0_19, %c0_20] : memref<4x1xf32, #tpu.memory_space<vmem>>, vector<4x1xf32>
    %28 = vector.broadcast %27 : vector<4x1xf32> to vector<4x8xf32>
    %29 = arith.addf %26, %28 : vector<4x8xf32>
    %cst_21 = arith.constant 5.000000e-01 : f32
    %30 = vector.broadcast %cst_21 : f32 to vector<4x8xf32>
    %31 = arith.mulf %30, %29 : vector<4x8xf32>
    %32 = math.tanh %31 : vector<4x8xf32>
    %cst_22 = arith.constant 1.000000e+00 : f32
    %33 = vector.broadcast %cst_22 : f32 to vector<4x8xf32>
    %34 = arith.addf %32, %33 : vector<4x8xf32>
    %cst_23 = arith.constant 5.000000e-01 : f32
    %35 = vector.broadcast %cst_23 : f32 to vector<4x8xf32>
    %36 = arith.mulf %35, %34 : vector<4x8xf32>
    %c0_24 = arith.constant 0 : index
    %c0_25 = arith.constant 0 : index
    %37 = vector.load %arg8[%c0_24, %c0_25] : memref<4x8xf32, #tpu.memory_space<vmem>>, vector<4x8xf32>
    tpu.vector_store %arg8[%c0_24, %c0_25], %36 {strides = array<i32>} : memref<4x8xf32, #tpu.memory_space<vmem>>, vector<4x8xf32>,
    return
  }
  func.func @transform_0(%arg0: i32) -> (i32, i32) {
    %c0_i32 = arith.constant 0 : i32
    %c0_i32_0 = arith.constant 0 : i32
    return %arg0, %c0_i32 : i32, i32
  }
  func.func @transform_1(%arg0: i32) -> (i32, i32) {
    %c0_i32 = arith.constant 0 : i32
    %c0_i32_0 = arith.constant 0 : i32
    %c0_i32_1 = arith.constant 0 : i32
    return %c0_i32, %c0_i32_0 : i32, i32
  }
  func.func @transform_2(%arg0: i32) -> (i32, i32) {
    %c0_i32 = arith.constant 0 : i32
    %c0_i32_0 = arith.constant 0 : i32
    %c0_i32_1 = arith.constant 0 : i32
    return %c0_i32, %c0_i32_0 : i32, i32
  }
  func.func @transform_3(%arg0: i32) -> (i32, i32) {
    %c0_i32 = arith.constant 0 : i32
    %c0_i32_0 = arith.constant 0 : i32
    %c0_i32_1 = arith.constant 0 : i32
    return %c0_i32, %c0_i32_0 : i32, i32
  }
  func.func @transform_4(%arg0: i32) -> (i32, i32) {
    %c0_i32 = arith.constant 0 : i32
    %c0_i32_0 = arith.constant 0 : i32
    %c0_i32_1 = arith.constant 0 : i32
    return %c0_i32, %c0_i32_0 : i32, i32
  }
  func.func @transform_5(%arg0: i32) -> (i32, i32) {
    %c0_i32 = arith.constant 0 : i32
    %c0_i32_0 = arith.constant 0 : i32
    %c0_i32_1 = arith.constant 0 : i32
    return %c0_i32, %c0_i32_0 : i32, i32
  }
  func.func @transform_6(%arg0: i32) -> (i32, i32) {
    %c0_i32 = arith.constant 0 : i32
    %c0_i32_0 = arith.constant 0 : i32
    %c0_i32_1 = arith.constant 0 : i32
    return %c0_i32, %c0_i32_0 : i32, i32
  }
  func.func @transform_7(%arg0: i32) -> (i32, i32) {
    %c0_i32 = arith.constant 0 : i32
    %c0_i32_0 = arith.constant 0 : i32
    return %c0_i32, %arg0 : i32, i32
  }
}

</mosaic_0001>

<llo_original>
// kernel: sigmoid_model_forward.1
$region0: #{sigmoid_model_forward.1}
  #allocation0 [shape = 'u32[]', space=smem, size = 0x4, offset = 0x4, fixed_abs, tag = 'smem constant byte address 0x4 - core index']
  #allocation1 [shape = 'u32[144,128]{1,0:T(1,128)}', space=vmem, size = 0x12000, scoped, tag = 'internal scratch']
  %s0 = inlined_call_operand.hbm [shape: f32[8,32], index: 0, kind: input, shape index: {}]
  %s1 = inlined_call_operand.vmem [shape: f32[16,32], index: 1, kind: input, shape index: {}]
  %s2 = inlined_call_operand.vmem [shape: f32[16,1], index: 2, kind: input, shape index: {}]
  %s3 = inlined_call_operand.vmem [shape: f32[16,16], index: 3, kind: input, shape index: {}]
  %s4 = inlined_call_operand.vmem [shape: f32[16,1], index: 4, kind: input, shape index: {}]
  %s5 = inlined_call_operand.vmem [shape: f32[4,16], index: 5, kind: input, shape index: {}]
  %s6 = inlined_call_operand.vmem [shape: f32[4,1], index: 6, kind: input, shape index: {}]
  %s7 = inlined_call_operand.hbm [shape: f32[4,8], index: 7, kind: output, shape index: {}]
  %s8 = sld [smem:[#allocation0]]
  $region42: #{sigmoid_model_forward.1} parent=0
    _
  %s10 = ssub.s32 1, %s8
  %s11 = scalar_select 0, %s10, %s8
  $region1: #{sigmoid_model_forward.1} parent=0
    #allocation2 [shape = 'u8[4096]{0}', space=vmem, size = 0x1000, scoped, tag = 'input window, operand 0, single buffered']
    #allocation3 [shape = 's32[1]{0}', space=sflag, size = 0x4, scoped, tag = 'scoped memory for sigmoid_model_forward.1']
    #allocation4 [shape = 's32[1]{0}', space=sflag, size = 0x4, scoped, tag = 'scoped memory for sigmoid_model_forward.1']
    #allocation5 [shape = 'u8[2048]{0}', space=vmem, size = 0x800, scoped, tag = 'output window, operand 0, single buffered']
    %12 = vsyncpa [#allocation3], 0
    %13 = vsyncpa [#allocation4], 0
    // Predicated region
    $region2: #{sigmoid_model_forward.1} parent=1 // pred_check
      _
    $region3: #{sigmoid_model_forward.1} parent=1 // pred_check_branch
      %15 = sbr.rel (0) target = $region5
    $region4: #{sigmoid_model_forward.1} parent=1 // pred_region
      %s17 = ssub.s32 128, 128
      %18 = vsyncadd [#allocation3], %s17
      %s20 = sshll.u32 [#allocation2], 4
      %s21 = int_to_ptr.vmem [resolvable:$true] %s20
      %23 = dma.hbm_to_vmem [thread:$0]  %s0, 128, %s21, [#allocation3]
    $region5: #{sigmoid_model_forward.1} parent=1 // pred_fallthru
      _
    // Predicated region
    $region6: #{sigmoid_model_forward.1} parent=1 // pred_check
      _
    $region7: #{sigmoid_model_forward.1} parent=1 // pred_check_branch
      %25 = sbr.rel (0) target = $region9
    $region8: #{sigmoid_model_forward.1} parent=1 // pred_region
      _
    $region9: #{sigmoid_model_forward.1} parent=1 // pred_fallthru
      _
    // Predicated region
    $region10: #{sigmoid_model_forward.1} parent=1 // pred_check
      _
    $region11: #{sigmoid_model_forward.1} parent=1 // pred_check_branch
      %27 = sbr.rel (0) target = $region13
    $region12: #{sigmoid_model_forward.1} parent=1 // pred_region
      _
    $region13: #{sigmoid_model_forward.1} parent=1 // pred_fallthru
      _
    // Predicated region
    $region14: #{sigmoid_model_forward.1} parent=1 // pred_check
      _
    $region15: #{sigmoid_model_forward.1} parent=1 // pred_check_branch
      %29 = sbr.rel (0) target = $region17
    $region16: #{sigmoid_model_forward.1} parent=1 // pred_region
      _
    $region17: #{sigmoid_model_forward.1} parent=1 // pred_fallthru
      _
    // Predicated region
    $region18: #{sigmoid_model_forward.1} parent=1 // pred_check
      _
    $region19: #{sigmoid_model_forward.1} parent=1 // pred_check_branch
      %31 = sbr.rel (0) target = $region21
    $region20: #{sigmoid_model_forward.1} parent=1 // pred_region
      _
    $region21: #{sigmoid_model_forward.1} parent=1 // pred_fallthru
      _
    // Predicated region
    $region22: #{sigmoid_model_forward.1} parent=1 // pred_check
      _
    $region23: #{sigmoid_model_forward.1} parent=1 // pred_check_branch
      %33 = sbr.rel (0) target = $region25
    $region24: #{sigmoid_model_forward.1} parent=1 // pred_region
      _
    $region25: #{sigmoid_model_forward.1} parent=1 // pred_fallthru
      _
    // Predicated region
    $region26: #{sigmoid_model_forward.1} parent=1 // pred_check
      _
    $region27: #{sigmoid_model_forward.1} parent=1 // pred_check_branch
      %35 = sbr.rel (0) target = $region29
    $region28: #{sigmoid_model_forward.1} parent=1 // pred_region
      _
    $region29: #{sigmoid_model_forward.1} parent=1 // pred_fallthru
      _
    // Predicated region
    $region30: #{sigmoid_model_forward.1} parent=1 // pred_check
      _
    $region31: #{sigmoid_model_forward.1} parent=1 // pred_check_branch
      %37 = sbr.rel (0) target = $region33
    $region32: #{sigmoid_model_forward.1} parent=1 // pred_region
      %38 = dma.done [#allocation3], 128
    $region33: #{sigmoid_model_forward.1} parent=1 // pred_fallthru
      _
    %v39 = vld [vmem:[#allocation2] sm:$0xff]
    %v40 = vld [vmem:[%s1] sm:$0xff]
    %v41 = vld [vmem:[%s1 + $0x8] sm:$0xff]
    %v42 = vld [vmem:[%s2] sm:$0xff]
    %v43 = vld [vmem:[%s2 + $0x8] sm:$0xff]
    %45 = vset.pattern.permute.xlu0 0
    %46 = vperm.xlu0 %45, %v42
    %v47 = vpop.permute.xlu0 %46
    %50 = vset.pattern.permute.xlu0 0
    %51 = vperm.xlu0 %50, %v43
    %v52 = vpop.permute.xlu0 %51
    %vm54 = vcmask 261120
    %v56 = vsel %vm54, %v40, 0
    %v59 = vsel %vm54, %v41, 0
    %v62 = vsel %vm54, %v39, 0
    %64 = vmatprep.subr.mxu0 0.0
    %65 = vmatpush1.xpose.msra.mxu0 0.0
    %66 = vmatprep.subr.mxu0 0.0
    %67 = vmatpush1.xpose.msra.mxu0 0.0
    %68 = vmatprep.subr.mxu0 0.0
    %69 = vmatpush1.xpose.msra.mxu0 0.0
    %70 = vmatprep.subr.mxu0 0.0
    %71 = vmatpush1.xpose.msra.mxu0 0.0
    %72 = vmatprep.subr.mxu0 0.0
    %73 = vmatpush1.xpose.msra.mxu0 0.0
    %74 = vmatprep.subr.mxu0 0.0
    %75 = vmatpush1.xpose.msra.mxu0 0.0
    %76 = vmatprep.subr.mxu0 0.0
    %77 = vmatpush1.xpose.msra.mxu0 0.0
    %78 = vmatprep.subr.mxu0 0.0
    %79 = vmatpush1.xpose.msra.mxu0 0.0
    %80 = vmatprep.subr.mxu0 0.0
    %81 = vmatpush1.xpose.msra.mxu0 0.0
    %82 = vmatprep.subr.mxu0 0.0
    %83 = vmatpush1.xpose.msra.mxu0 0.0
    %84 = vmatprep.subr.mxu0 0.0
    %85 = vmatpush1.xpose.msra.mxu0 0.0
    %86 = vmatprep.subr.mxu0 0.0
    %87 = vmatpush1.xpose.msra.mxu0 0.0
    %88 = vmatprep.subr.mxu0 0.0
    %89 = vmatpush1.xpose.msra.mxu0 0.0
    %90 = vmatprep.subr.mxu0 0.0
    %91 = vmatpush1.xpose.msra.mxu0 0.0
    %92 = vmatprep.subr.mxu0 0.0
    %93 = vmatpush1.xpose.msra.mxu0 0.0
    %94 = vmatprep.subr.mxu0 0.0
    %95 = vmatpush1.xpose.msra.mxu0 %v62
    %96 = vmatprep.subr.mxu0 0.0
    %97 = vmatpush2.xpose.msra.mxu0 0.0
    %98 = vmatprep.subr.mxu0 0.0
    %99 = vmatpush2.xpose.msra.mxu0 0.0
    %100 = vmatprep.subr.mxu0 0.0
    %101 = vmatpush2.xpose.msra.mxu0 0.0
    %102 = vmatprep.subr.mxu0 0.0
    %103 = vmatpush2.xpose.msra.mxu0 0.0
    %104 = vmatprep.subr.mxu0 0.0
    %105 = vmatpush2.xpose.msra.mxu0 0.0
    %106 = vmatprep.subr.mxu0 0.0
    %107 = vmatpush2.xpose.msra.mxu0 0.0
    %108 = vmatprep.subr.mxu0 0.0
    %109 = vmatpush2.xpose.msra.mxu0 0.0
    %110 = vmatprep.subr.mxu0 0.0
    %111 = vmatpush2.xpose.msra.mxu0 0.0
    %112 = vmatprep.subr.mxu0 0.0
    %113 = vmatpush2.xpose.msra.mxu0 0.0
    %114 = vmatprep.subr.mxu0 0.0
    %115 = vmatpush2.xpose.msra.mxu0 0.0
    %116 = vmatprep.subr.mxu0 0.0
    %117 = vmatpush2.xpose.msra.mxu0 0.0
    %118 = vmatprep.subr.mxu0 0.0
    %119 = vmatpush2.xpose.msra.mxu0 0.0
    %120 = vmatprep.subr.mxu0 0.0
    %121 = vmatpush2.xpose.msra.mxu0 0.0
    %122 = vmatprep.subr.mxu0 0.0
    %123 = vmatpush2.xpose.msra.mxu0 0.0
    %124 = vmatprep.subr.mxu0 0.0
    %125 = vmatpush2.xpose.msra.mxu0 0.0
    %126 = vmatprep.subr.mxu0 0.0
    %127 = vmatpush2.xpose.msra.mxu0 0.0
    %128 = vmatprep.mubr.f32.mxu0 0.0
    %129 = vmatmul.mubr.f32.gmra.mxu0 %v56
    %v130 = vpop.f32.mrf.mxu0
    %v131 = vadd.f32 %v47, %v130
    %v132 = vpop.f32.mrf.mxu0
    %133 = vmatprep.mubr.f32.mxu0 0.0
    %134 = vmatmul.mubr.f32.gmra.mxu0 %v59
    %v135 = vpop.f32.mrf.mxu0
    %v136 = vadd.f32 %v52, %v135
    %v137 = vpop.f32.mrf.mxu0
    %138 = vdwg.mxu0
    %v139 = vmul.f32 %v131, 0.5
    %v140 = vmul.f32 %v136, 0.5
    %v141 = vtanh.pop %v139
    %v142 = vtanh.pop %v140
    %v143 = vadd.f32 %v141, 1.0
    %v144 = vadd.f32 %v142, 1.0
    %v145 = vmul.f32 %v143, 0.5
    %v146 = vmul.f32 %v144, 0.5
    %v147 = vld [vmem:[%s3] sm:$0xff]
    %v148 = vld [vmem:[%s3 + $0x8] sm:$0xff]
    %v149 = vld [vmem:[%s4] sm:$0xff]
    %v150 = vld [vmem:[%s4 + $0x8] sm:$0xff]
    %152 = vset.pattern.permute.xlu0 0
    %153 = vperm.xlu0 %152, %v149
    %v154 = vpop.permute.xlu0 %153
    %157 = vset.pattern.permute.xlu0 0
    %158 = vperm.xlu0 %157, %v150
    %v159 = vpop.permute.xlu0 %158
    %vm161 = vcmask 130048
    %v163 = vsel %vm161, %v147, 0
    %v166 = vsel %vm161, %v148, 0
    %168 = vmatprep.subr.mxu0 0.0
    %169 = vmatpush1.msra.mxu0 0.0
    %170 = vmatprep.subr.mxu0 0.0
    %171 = vmatpush1.msra.mxu0 0.0
    %172 = vmatprep.subr.mxu0 0.0
    %173 = vmatpush1.msra.mxu0 0.0
    %174 = vmatprep.subr.mxu0 0.0
    %175 = vmatpush1.msra.mxu0 0.0
    %176 = vmatprep.subr.mxu0 0.0
    %177 = vmatpush1.msra.mxu0 0.0
    %178 = vmatprep.subr.mxu0 0.0
    %179 = vmatpush1.msra.mxu0 0.0
    %180 = vmatprep.subr.mxu0 0.0
    %181 = vmatpush1.msra.mxu0 0.0
    %182 = vmatprep.subr.mxu0 0.0
    %183 = vmatpush1.msra.mxu0 0.0
    %184 = vmatprep.subr.mxu0 0.0
    %185 = vmatpush1.msra.mxu0 0.0
    %186 = vmatprep.subr.mxu0 0.0
    %187 = vmatpush1.msra.mxu0 0.0
    %188 = vmatprep.subr.mxu0 0.0
    %189 = vmatpush1.msra.mxu0 0.0
    %190 = vmatprep.subr.mxu0 0.0
    %191 = vmatpush1.msra.mxu0 0.0
    %192 = vmatprep.subr.mxu0 0.0
    %193 = vmatpush1.msra.mxu0 0.0
    %194 = vmatprep.subr.mxu0 0.0
    %195 = vmatpush1.msra.mxu0 0.0
    %196 = vmatprep.subr.mxu0 0.0
    %197 = vmatpush1.msra.mxu0 %v146
    %198 = vmatprep.subr.mxu0 0.0
    %199 = vmatpush1.msra.mxu0 %v145
    %200 = vmatprep.subr.mxu0 0.0
    %201 = vmatpush2.msra.mxu0 0.0
    %202 = vmatprep.subr.mxu0 0.0
    %203 = vmatpush2.msra.mxu0 0.0
    %204 = vmatprep.subr.mxu0 0.0
    %205 = vmatpush2.msra.mxu0 0.0
    %206 = vmatprep.subr.mxu0 0.0
    %207 = vmatpush2.msra.mxu0 0.0
    %208 = vmatprep.subr.mxu0 0.0
    %209 = vmatpush2.msra.mxu0 0.0
    %210 = vmatprep.subr.mxu0 0.0
    %211 = vmatpush2.msra.mxu0 0.0
    %212 = vmatprep.subr.mxu0 0.0
    %213 = vmatpush2.msra.mxu0 0.0
    %214 = vmatprep.subr.mxu0 0.0
    %215 = vmatpush2.msra.mxu0 0.0
    %216 = vmatprep.subr.mxu0 0.0
    %217 = vmatpush2.msra.mxu0 0.0
    %218 = vmatprep.subr.mxu0 0.0
    %219 = vmatpush2.msra.mxu0 0.0
    %220 = vmatprep.subr.mxu0 0.0
    %221 = vmatpush2.msra.mxu0 0.0
    %222 = vmatprep.subr.mxu0 0.0
    %223 = vmatpush2.msra.mxu0 0.0
    %224 = vmatprep.subr.mxu0 0.0
    %225 = vmatpush2.msra.mxu0 0.0
    %226 = vmatprep.subr.mxu0 0.0
    %227 = vmatpush2.msra.mxu0 0.0
    %228 = vmatprep.subr.mxu0 0.0
    %229 = vmatpush2.msra.mxu0 0.0
    %230 = vmatprep.subr.mxu0 0.0
    %231 = vmatpush2.msra.mxu0 0.0
    %232 = vmatprep.mubr.f32.mxu0 0.0
    %233 = vmatmul.mubr.f32.gmra.mxu0 %v163
    %v234 = vpop.f32.mrf.mxu0
    %v235 = vadd.f32 %v154, %v234
    %v236 = vpop.f32.mrf.mxu0
    %237 = vmatprep.mubr.f32.mxu0 0.0
    %238 = vmatmul.mubr.f32.gmra.mxu0 %v166
    %v239 = vpop.f32.mrf.mxu0
    %v240 = vadd.f32 %v159, %v239
    %v241 = vpop.f32.mrf.mxu0
    %242 = vdwg.mxu0
    %v243 = vmul.f32 %v235, 0.5
    %v244 = vmul.f32 %v240, 0.5
    %v245 = vtanh.pop %v243
    %v246 = vtanh.pop %v244
    %v247 = vadd.f32 %v245, 1.0
    %v248 = vadd.f32 %v246, 1.0
    %v249 = vmul.f32 %v247, 0.5
    %v250 = vmul.f32 %v248, 0.5
    %v251 = vld [vmem:[%s5] sm:$0xf]
    %v252 = vld [vmem:[%s6] sm:$0xf]
    %254 = vset.pattern.permute.xlu0 0
    %255 = vperm.xlu0 %254, %v252
    %v256 = vpop.permute.xlu0 %255
    %v259 = vsel %vm161, %v251, 0
    %261 = vmatprep.subr.mxu0 0.0
    %262 = vmatpush1.msra.mxu0 0.0
    %263 = vmatprep.subr.mxu0 0.0
    %264 = vmatpush1.msra.mxu0 0.0
    %265 = vmatprep.subr.mxu0 0.0
    %266 = vmatpush1.msra.mxu0 0.0
    %267 = vmatprep.subr.mxu0 0.0
    %268 = vmatpush1.msra.mxu0 0.0
    %269 = vmatprep.subr.mxu0 0.0
    %270 = vmatpush1.msra.mxu0 0.0
    %271 = vmatprep.subr.mxu0 0.0
    %272 = vmatpush1.msra.mxu0 0.0
    %273 = vmatprep.subr.mxu0 0.0
    %274 = vmatpush1.msra.mxu0 0.0
    %275 = vmatprep.subr.mxu0 0.0
    %276 = vmatpush1.msra.mxu0 0.0
    %277 = vmatprep.subr.mxu0 0.0
    %278 = vmatpush1.msra.mxu0 0.0
    %279 = vmatprep.subr.mxu0 0.0
    %280 = vmatpush1.msra.mxu0 0.0
    %281 = vmatprep.subr.mxu0 0.0
    %282 = vmatpush1.msra.mxu0 0.0
    %283 = vmatprep.subr.mxu0 0.0
    %284 = vmatpush1.msra.mxu0 0.0
    %285 = vmatprep.subr.mxu0 0.0
    %286 = vmatpush1.msra.mxu0 0.0
    %287 = vmatprep.subr.mxu0 0.0
    %288 = vmatpush1.msra.mxu0 0.0
    %289 = vmatprep.subr.mxu0 0.0
    %290 = vmatpush1.msra.mxu0 %v250
    %291 = vmatprep.subr.mxu0 0.0
    %292 = vmatpush1.msra.mxu0 %v249
    %293 = vmatprep.subr.mxu0 0.0
    %294 = vmatpush2.msra.mxu0 0.0
    %295 = vmatprep.subr.mxu0 0.0
    %296 = vmatpush2.msra.mxu0 0.0
    %297 = vmatprep.subr.mxu0 0.0
    %298 = vmatpush2.msra.mxu0 0.0
    %299 = vmatprep.subr.mxu0 0.0
    %300 = vmatpush2.msra.mxu0 0.0
    %301 = vmatprep.subr.mxu0 0.0
    %302 = vmatpush2.msra.mxu0 0.0
    %303 = vmatprep.subr.mxu0 0.0
    %304 = vmatpush2.msra.mxu0 0.0
    %305 = vmatprep.subr.mxu0 0.0
    %306 = vmatpush2.msra.mxu0 0.0
    %307 = vmatprep.subr.mxu0 0.0
    %308 = vmatpush2.msra.mxu0 0.0
    %309 = vmatprep.subr.mxu0 0.0
    %310 = vmatpush2.msra.mxu0 0.0
    %311 = vmatprep.subr.mxu0 0.0
    %312 = vmatpush2.msra.mxu0 0.0
    %313 = vmatprep.subr.mxu0 0.0
    %314 = vmatpush2.msra.mxu0 0.0
    %315 = vmatprep.subr.mxu0 0.0
    %316 = vmatpush2.msra.mxu0 0.0
    %317 = vmatprep.subr.mxu0 0.0
    %318 = vmatpush2.msra.mxu0 0.0
    %319 = vmatprep.subr.mxu0 0.0
    %320 = vmatpush2.msra.mxu0 0.0
    %321 = vmatprep.subr.mxu0 0.0
    %322 = vmatpush2.msra.mxu0 0.0
    %323 = vmatprep.subr.mxu0 0.0
    %324 = vmatpush2.msra.mxu0 0.0
    %325 = vmatprep.mubr.f32.mxu0 0.0
    %326 = vmatmul.mubr.f32.gmra.mxu0 %v259
    %v327 = vpop.f32.mrf.mxu0
    %v328 = vadd.f32 %v256, %v327
    %v329 = vpop.f32.mrf.mxu0
    %330 = vdwg.mxu0
    %v331 = vmul.f32 %v328, 0.5
    %v332 = vtanh.pop %v331
    %v333 = vadd.f32 %v332, 1.0
    %v334 = vmul.f32 %v333, 0.5
    %vm335 = vcmask 60416
    %336 = vst.msk [vmem:[#allocation5] sm:$0xf] %vm335, %v334
    // Predicated region
    $region34: #{sigmoid_model_forward.1} parent=1 // pred_check
      _
    $region35: #{sigmoid_model_forward.1} parent=1 // pred_check_branch
      %338 = sbr.rel (0) target = $region37
    $region36: #{sigmoid_model_forward.1} parent=1 // pred_region
      %s340 = ssub.s32 64, 64
      %341 = vsyncadd [#allocation4], %s340
      %s343 = sshll.u32 [#allocation5], 4
      %s344 = int_to_ptr.vmem [resolvable:$true] %s343
      %346 = dma.vmem_to_hbm [thread:$0]  %s344, 64, %s7, [#allocation4]
    $region37: #{sigmoid_model_forward.1} parent=1 // pred_fallthru
      _
    // Predicated region
    $region38: #{sigmoid_model_forward.1} parent=1 // pred_check
      _
    $region39: #{sigmoid_model_forward.1} parent=1 // pred_check_branch
      %348 = sbr.rel (0) target = $region41
    $region40: #{sigmoid_model_forward.1} parent=1 // pred_region
      %349 = dma.done [#allocation4], 64
    $region41: #{sigmoid_model_forward.1} parent=1 // pred_fallthru
      _
    %350 = vsyncpa [#allocation3], 1
    %351 = vsyncpa [#allocation4], 1

</llo_original>
